<compile_context>
chip_gen: v6e
topology: v6e:2x2x1
jax: 0.10.0
libtpu: 0.0.40
codegen_flags: <defaults>
</compile_context>

<pallas_src>
import jax
import jax.numpy as jnp
import numpy as np
from jax.experimental import pallas as pl
from jax.experimental.pallas import tpu as pltpu


# ------------------------- model hyper-parameters -------------------------
HIDDEN = 32          # hidden_channels
KSIZE = 3            # kernel_size (odd -> symmetric 'same' padding)
N_LAYERS = 3
DIL_RATE = 2         # dilation_rate
GIN = 16             # gin_channels
B = 2                # batch
T = 16               # sequence length
GATE_K = KSIZE * HIDDEN + GIN + 1   # 113: fused contraction (taps + cond + bias)
RS_K = HIDDEN + 1                   # 33 : fused contraction (acts + bias)


# ------------------------------ Pallas kernel ------------------------------
def wn_kernel(x_ref, g_ref, wgate_ref, wrs_ref, out_ref):
    """Whole WN stack, batch folded into rows, one grid point, no scratch.

    x_ref     : (B*T, H)                 input activations (row r = b*T + t)
    g_ref     : (B*T, GIN)               conditioning input
    wgate_ref : (L, K*H+GIN+1, 2H)       fused gate weights; rows =
                                         [w_k0.T ; w_k1.T ; w_k2.T ; wc_i.T ;
                                          b_in+bc]; cols = [tanh | sigmoid]
    wrs_ref   : (L, H+1, 2H)             fused res/skip weights; rows =
                                         [w_rs.T ; b_rs]; cols = [res | skip]
                                         (last layer: res cols are zero, skip
                                          cols hold the full H-wide res_skip)
    out_ref   : (B*T, H)                 skip-sum output
    """
    n_rows, h = x_ref.shape
    n_layers = wgate_ref.shape[0]

    # Loop-invariant pieces, hoisted out of the layer loop.
    ones_col = jnp.ones((n_rows, 1), jnp.float32)
    tail = jnp.concatenate([g_ref[...], ones_col], axis=-1)     # (B*T, GIN+1)

    # Position within sequence for 'same'-padding masks:
    # row r = b*T + t  ->  t = r mod T.
    t_pos = jax.lax.broadcasted_iota(jnp.int32, (n_rows, h), 0) % T

    x = x_ref[...]
    acc = jnp.zeros((n_rows, 2 * h), jnp.float32)               # [res-sum | skip-sum]

    for i in range(n_layers):
        d = DIL_RATE ** i

        # Dilated 'same' conv taps: x[t-d], x[t], x[t+d] (zero outside [0,T)).
        # The roll on the flat (B*T) axis may wrap across batch boundaries,
        # but those rows are exactly the ones masked to zero.
        left = jnp.where(t_pos >= d, jnp.roll(x, d, axis=0), 0.0)
        right = jnp.where(t_pos < T - d, jnp.roll(x, -d, axis=0), 0.0)

        # Stacked operand built in registers (no VMEM store/reload round trip):
        # [x(t-d) | x(t) | x(t+d) | g | 1]  ->  (B*T, K*H+GIN+1)
        taps = jnp.concatenate([left, x, right, tail], axis=-1)

        # ONE fused MXU pass per layer: dilated conv + cond proj + biases,
        # tanh and sigmoid halves side by side (N = 2H = 64 lanes).
        z = jnp.dot(taps, wgate_ref[i], preferred_element_type=jnp.float32)
        acts = jnp.tanh(z[:, :h]) * jax.nn.sigmoid(z[:, h:])
        # dropout(p=0.0) is the identity.

        # ONE fused res/skip matmul (bias folded via the 1.0 column).
        acts_ext = jnp.concatenate([acts, ones_col], axis=-1)   # (B*T, H+1)
        rs = jnp.dot(acts_ext, wrs_ref[i], preferred_element_type=jnp.float32)
        acc = acc + rs                                          # skip half accumulates
        if i < n_layers - 1:
            x = x + rs[:, :h]                                   # res half

    out_ref[...] = acc[:, h:]                                   # skip-sum only


# ------------------------------ JAX wrapper -------------------------------
def weight_norm(v, g):
    """PyTorch weight_norm(dim=0): w = g * v / ||v||, norm over non-0 dims."""
    norm = jnp.sqrt(jnp.sum(v * v, axis=tuple(range(1, v.ndim)), keepdims=True))
    return g.reshape((-1,) + (1,) * (v.ndim - 1)) * v / norm


@jax.jit
def wn_forward(x_nct, g_nct, wgate, wrs):
    """x_nct: (B, H, T), g_nct: (B, GIN, T) -> (B, H, T)  (PyTorch layout)."""
    # TODO(synk): if the producer can hand over (B, T, C) directly, drop these
    # relayout transposes from the wrapper.
    x_flat = jnp.transpose(x_nct, (0, 2, 1)).reshape(B * T, HIDDEN)
    g_flat = jnp.transpose(g_nct, (0, 2, 1)).reshape(B * T, GIN)

    vmem = pl.BlockSpec(memory_space=pltpu.MemorySpace.VMEM)
    out_flat = pl.pallas_call(
        wn_kernel,
        out_shape=jax.ShapeDtypeStruct((B * T, HIDDEN), jnp.float32),
        in_specs=[vmem] * 4,
        out_specs=vmem,
    )(x_flat, g_flat, wgate, wrs)

    return jnp.transpose(out_flat.reshape(B, T, HIDDEN), (0, 2, 1))


# --------------------------- pure-JAX reference ---------------------------
def conv1d_ref(x, w, b, dilation, padding):
    # x: (B, C, T), w: (O, I, K), b: (O,)
    out = jax.lax.conv_general_dilated(
        x, w, window_strides=(1,), padding=[(padding, padding)],
        rhs_dilation=(dilation,), dimension_numbers=("NCH", "OIH", "NCH"))
    return out + b[None, :, None]


def wn_reference(x, g, wc, bc, w_in_list, b_in_list, w_rs_list, b_rs_list):
    output = jnp.zeros_like(x)
    g_proj = conv1d_ref(g, wc, bc, 1, 0)
    for i in range(N_LAYERS):
        d = DIL_RATE ** i
        pad = (KSIZE * d - d) // 2
        x_in = conv1d_ref(x, w_in_list[i], b_in_list[i], d, pad)
        g_l = g_proj[:, i * 2 * HIDDEN:(i + 1) * 2 * HIDDEN, :]
        z = x_in + g_l
        acts = jnp.tanh(z[:, :HIDDEN, :]) * jax.nn.sigmoid(z[:, HIDDEN:, :])
        rs = conv1d_ref(acts, w_rs_list[i], b_rs_list[i], 1, 0)
        if i < N_LAYERS - 1:
            x = x + rs[:, :HIDDEN, :]
            output = output + rs[:, HIDDEN:, :]
        else:
            output = output + rs
    return output


# ------------------------------- main -------------------------------------
if __name__ == "__main__":
    key = jax.random.PRNGKey(0)
    keys = iter(jax.random.split(key, 64))

    def nrm(shape, scale=0.1):
        return (scale * jax.random.normal(next(keys), shape)).astype(jnp.float32)

    def pos(shape):
        return jax.random.uniform(next(keys), shape, jnp.float32, 0.5, 1.5)

    # inputs (PyTorch NCT layout)
    x = nrm((B, HIDDEN, T), 1.0)
    g = nrm((B, GIN, T), 1.0)

    # cond layer: Conv1d(GIN -> 2H*n_layers, k=1), weight-normed
    wc_v = nrm((2 * HIDDEN * N_LAYERS, GIN, 1))
    wc_g = pos((2 * HIDDEN * N_LAYERS,))
    bc = nrm((2 * HIDDEN * N_LAYERS,))
    wc = weight_norm(wc_v, wc_g)                         # (2H*L, GIN, 1)

    # in_layers: Conv1d(H -> 2H, k=K, dilation=2**i), weight-normed
    w_in_list, b_in_list = [], []
    for i in range(N_LAYERS):
        v = nrm((2 * HIDDEN, HIDDEN, KSIZE))
        gg = pos((2 * HIDDEN,))
        w_in_list.append(weight_norm(v, gg))
        b_in_list.append(nrm((2 * HIDDEN,)))

    # res_skip_layers: Conv1d(H -> 2H or H, k=1), weight-normed
    w_rs_list, b_rs_list = [], []
    for i in range(N_LAYERS):
        out_ch = 2 * HIDDEN if i < N_LAYERS - 1 else HIDDEN
        v = nrm((out_ch, HIDDEN, 1))
        gg = pos((out_ch,))
        w_rs_list.append(weight_norm(v, gg))
        b_rs_list.append(nrm((out_ch,)))

    # ---- pack / fuse params for the kernel ----
    # Fused per-layer gate weights (one MXU pass per layer):
    #   rows = [w_k0.T ; w_k1.T ; w_k2.T ; wc_i.T ; (b_in + bc)]
    #   cols = [tanh half (0:H) | sigmoid half (H:2H)]
    wc2 = wc[:, :, 0]                                    # (2H*L, GIN)
    gate_ws = []
    for i in range(N_LAYERS):
        w = w_in_list[i]                                 # (2H, H, K)
        wc_i = wc2[i * 2 * HIDDEN:(i + 1) * 2 * HIDDEN]  # (2H, GIN)
        bc_i = bc[i * 2 * HIDDEN:(i + 1) * 2 * HIDDEN]   # (2H,)
        rows = [jnp.transpose(w[:, :, k]) for k in range(KSIZE)]   # (H, 2H) x K
        rows.append(jnp.transpose(wc_i))                 # (GIN, 2H)
        rows.append((b_in_list[i] + bc_i)[None, :])      # (1, 2H) bias row
        gate_ws.append(jnp.concatenate(rows, axis=0))    # (K*H+GIN+1, 2H)
    wgate_k = jnp.stack(gate_ws)                         # (L, 113, 2H)

    # Fused per-layer res/skip weights:
    #   rows = [w_rs.T ; b_rs], cols = [res (0:H) | skip (H:2H)].
    #   Last layer: res cols zero, skip cols hold the full H-wide res_skip.
    rs_ws = []
    for i in range(N_LAYERS):
        w2 = w_rs_list[i][:, :, 0]                       # (out_ch, H)
        b_i = b_rs_list[i]                               # (out_ch,)
        if i < N_LAYERS - 1:
            w_full = jnp.transpose(w2)                   # (H, 2H)
            b_full = b_i[None, :]                        # (1, 2H)
        else:
            w_full = jnp.concatenate(
                [jnp.zeros((HIDDEN, HIDDEN), jnp.float32),
                 jnp.transpose(w2)], axis=1)             # (H, 2H)
            b_full = jnp.concatenate(
                [jnp.zeros((HIDDEN,), jnp.float32), b_i], axis=0)[None, :]
        rs_ws.append(jnp.concatenate([w_full, b_full], axis=0))    # (H+1, 2H)
    wrs_k = jnp.stack(rs_ws)                             # (L, 33, 2H)

    # ---- run Pallas kernel ----
    out = wn_forward(x, g, wgate_k, wrs_k)
    out = jax.block_until_ready(out)

    # ---- verify against plain-JAX reference ----
    ref = wn_reference(x, g, wc, bc, w_in_list, b_in_list, w_rs_list, b_rs_list)
    ref = jax.block_until_ready(ref)
    np.testing.assert_allclose(np.asarray(out), np.asarray(ref),
                               rtol=1e-4, atol=1e-4)

    print("KERNEL_OK")
</pallas_src>

<mosaic_0001>
module attributes {stable_mosaic.version = 11 : i64} {
  func.func @wn_kernel(%arg0: memref<32x32xf32, #tpu.memory_space<vmem>>, %arg1: memref<32x16xf32, #tpu.memory_space<vmem>>, %arg2: memref<3x113x64xf32, #tpu.memory_space<vmem>>, %arg3: memref<3x33x64xf32, #tpu.memory_space<vmem>>, %arg4: memref<32x32xf32, #tpu.memory_space<vmem>>) attributes {dimension_semantics = [], scalar_prefetch = 0 : i64, scratch_operands = 0 : i64, tpu.core_type = #tpu.core_type<tc>} {
    %cst = arith.constant 1.000000e+00 : f32
    %0 = vector.broadcast %cst : f32 to vector<32x1xf32>
    %c0 = arith.constant 0 : index
    %c0_0 = arith.constant 0 : index
    %1 = vector.load %arg1[%c0, %c0_0] : memref<32x16xf32, #tpu.memory_space<vmem>>, vector<32x16xf32>
    %2 = tpu.concatenate %1, %0 in 1 : vector<32x16xf32>, vector<32x1xf32> -> vector<32x17xf32>
    %3 = tpu.iota {dimensions = array<i32: 0>} : vector<32x32xi32>
    %c16_i32 = arith.constant 16 : i32
    %c0_i32 = arith.constant 0 : i32
    %4 = arith.cmpi eq, %c16_i32, %c0_i32 : i32
    %c1_i32 = arith.constant 1 : i32
    %5 = arith.select %4, %c1_i32, %c16_i32 : i32
    %6 = vector.broadcast %5 : i32 to vector<32x32xi32>
    %7 = arith.remsi %3, %6 : vector<32x32xi32>
    %c0_i32_1 = arith.constant 0 : i32
    %8 = vector.broadcast %c0_i32_1 : i32 to vector<32x32xi32>
    %9 = arith.cmpi ne, %7, %8 : vector<32x32xi32>
    %c0_i32_2 = arith.constant 0 : i32
    %10 = vector.broadcast %c0_i32_2 : i32 to vector<32x32xi32>
    %11 = arith.cmpi slt, %7, %10 : vector<32x32xi32>
    %c0_i32_3 = arith.constant 0 : i32
    %12 = arith.cmpi slt, %5, %c0_i32_3 : i32
    %13 = vector.broadcast %12 : i1 to vector<32x32xi1>
    %14 = vector.broadcast %13 : vector<32x32xi1> to vector<32x32xi1>
    %15 = arith.xori %11, %14 : vector<32x32xi1>
    %16 = arith.andi %15, %9 : vector<32x32xi1>
    %17 = vector.broadcast %5 : i32 to vector<32x32xi32>
    %18 = arith.addi %7, %17 : vector<32x32xi32>
    %19 = arith.select %16, %18, %7 : vector<32x32xi1>, vector<32x32xi32>
    %c0_4 = arith.constant 0 : index
    %c0_5 = arith.constant 0 : index
    %20 = vector.load %arg0[%c0_4, %c0_5] : memref<32x32xf32, #tpu.memory_space<vmem>>, vector<32x32xf32>
    %cst_6 = arith.constant 0.000000e+00 : f32
    %21 = vector.broadcast %cst_6 : f32 to vector<32x64xf32>
    %c1_i32_7 = arith.constant 1 : i32
    %22 = vector.broadcast %c1_i32_7 : i32 to vector<32x32xi32>
    %23 = arith.cmpi sge, %19, %22 : vector<32x32xi32>
    %24 = vector.extract_strided_slice %20 {offsets = [31, 0], sizes = [1, 32], strides = [1, 1]} : vector<32x32xf32> to vector<1x32xf32>
    %25 = vector.extract_strided_slice %20 {offsets = [0, 0], sizes = [31, 32], strides = [1, 1]} : vector<32x32xf32> to vector<31x32xf32>
    %26 = tpu.concatenate %24, %25 in 0 : vector<1x32xf32>, vector<31x32xf32> -> vector<32x32xf32>
    %cst_8 = arith.constant 0.000000e+00 : f32
    %27 = vector.broadcast %cst_8 : f32 to vector<32x32xf32>
    %28 = arith.select %23, %26, %27 : vector<32x32xi1>, vector<32x32xf32>
    %c15_i32 = arith.constant 15 : i32
    %29 = vector.broadcast %c15_i32 : i32 to vector<32x32xi32>
    %30 = arith.cmpi slt, %19, %29 : vector<32x32xi32>
    %31 = vector.extract_strided_slice %20 {offsets = [1, 0], sizes = [31, 32], strides = [1, 1]} : vector<32x32xf32> to vector<31x32xf32>
    %32 = vector.extract_strided_slice %20 {offsets = [0, 0], sizes = [1, 32], strides = [1, 1]} : vector<32x32xf32> to vector<1x32xf32>
    %33 = tpu.concatenate %31, %32 in 0 : vector<31x32xf32>, vector<1x32xf32> -> vector<32x32xf32>
    %cst_9 = arith.constant 0.000000e+00 : f32
    %34 = vector.broadcast %cst_9 : f32 to vector<32x32xf32>
    %35 = arith.select %30, %33, %34 : vector<32x32xi1>, vector<32x32xf32>
    %36 = tpu.concatenate %28, %20, %35, %2 in 1 : vector<32x32xf32>, vector<32x32xf32>, vector<32x32xf32>, vector<32x17xf32> -> vector<32x113xf32>
    %c0_10 = arith.constant 0 : index
    %c0_11 = arith.constant 0 : index
    %c0_12 = arith.constant 0 : index
    %37 = vector.load %arg2[%c0_10, %c0_11, %c0_12] : memref<3x113x64xf32, #tpu.memory_space<vmem>>, vector<1x113x64xf32>
    %38 = vector.shape_cast %37 : vector<1x113x64xf32> to vector<113x64xf32>
    %cst_13 = arith.constant dense<0.000000e+00> : vector<32x64xf32>
    %39 = tpu.matmul %36, %38, %cst_13 {dimension_numbers = #tpu.dot_dimension_numbers<[1], [0], [0], [1], [0, 0, 1, 1], [], []>} : vector<32x113xf32>, vector<113x64xf32>, vector<32x64xf32> -> vector<32x64xf32>
    %40 = vector.extract_strided_slice %39 {offsets = [0, 0], sizes = [32, 32], strides = [1, 1]} : vector<32x64xf32> to vector<32x32xf32>
    %41 = math.tanh %40 : vector<32x32xf32>
    %42 = vector.extract_strided_slice %39 {offsets = [0, 32], sizes = [32, 32], strides = [1, 1]} : vector<32x64xf32> to vector<32x32xf32>
    %43 = arith.negf %42 : vector<32x32xf32>
    %44 = math.exp %43 : vector<32x32xf32>
    %cst_14 = arith.constant 1.000000e+00 : f32
    %45 = vector.broadcast %cst_14 : f32 to vector<32x32xf32>
    %46 = arith.addf %45, %44 : vector<32x32xf32>
    %47 = arith.divf %45, %46 : vector<32x32xf32>
    %48 = arith.mulf %41, %47 : vector<32x32xf32>
    %49 = tpu.concatenate %48, %0 in 1 : vector<32x32xf32>, vector<32x1xf32> -> vector<32x33xf32>
    %c0_15 = arith.constant 0 : index
    %c0_16 = arith.constant 0 : index
    %c0_17 = arith.constant 0 : index
    %50 = vector.load %arg3[%c0_15, %c0_16, %c0_17] : memref<3x33x64xf32, #tpu.memory_space<vmem>>, vector<1x33x64xf32>
    %51 = vector.shape_cast %50 : vector<1x33x64xf32> to vector<33x64xf32>
    %cst_18 = arith.constant dense<0.000000e+00> : vector<32x64xf32>
    %52 = tpu.matmul %49, %51, %cst_18 {dimension_numbers = #tpu.dot_dimension_numbers<[1], [0], [0], [1], [0, 0, 1, 1], [], []>} : vector<32x33xf32>, vector<33x64xf32>, vector<32x64xf32> -> vector<32x64xf32>
    %53 = arith.addf %21, %52 : vector<32x64xf32>
    %54 = vector.extract_strided_slice %52 {offsets = [0, 0], sizes = [32, 32], strides = [1, 1]} : vector<32x64xf32> to vector<32x32xf32>
    %55 = arith.addf %20, %54 : vector<32x32xf32>
    %c2_i32 = arith.constant 2 : i32
    %56 = vector.broadcast %c2_i32 : i32 to vector<32x32xi32>
    %57 = arith.cmpi sge, %19, %56 : vector<32x32xi32>
    %58 = vector.extract_strided_slice %55 {offsets = [30, 0], sizes = [2, 32], strides = [1, 1]} : vector<32x32xf32> to vector<2x32xf32>
    %59 = vector.extract_strided_slice %55 {offsets = [0, 0], sizes = [30, 32], strides = [1, 1]} : vector<32x32xf32> to vector<30x32xf32>
    %60 = tpu.concatenate %58, %59 in 0 : vector<2x32xf32>, vector<30x32xf32> -> vector<32x32xf32>
    %cst_19 = arith.constant 0.000000e+00 : f32
    %61 = vector.broadcast %cst_19 : f32 to vector<32x32xf32>
    %62 = arith.select %57, %60, %61 : vector<32x32xi1>, vector<32x32xf32>
    %c14_i32 = arith.constant 14 : i32
    %63 = vector.broadcast %c14_i32 : i32 to vector<32x32xi32>
    %64 = arith.cmpi slt, %19, %63 : vector<32x32xi32>
    %65 = vector.extract_strided_slice %55 {offsets = [2, 0], sizes = [30, 32], strides = [1, 1]} : vector<32x32xf32> to vector<30x32xf32>
    %66 = vector.extract_strided_slice %55 {offsets = [0, 0], sizes = [2, 32], strides = [1, 1]} : vector<32x32xf32> to vector<2x32xf32>
    %67 = tpu.concatenate %65, %66 in 0 : vector<30x32xf32>, vector<2x32xf32> -> vector<32x32xf32>
    %cst_20 = arith.constant 0.000000e+00 : f32
    %68 = vector.broadcast %cst_20 : f32 to vector<32x32xf32>
    %69 = arith.select %64, %67, %68 : vector<32x32xi1>, vector<32x32xf32>
    %70 = tpu.concatenate %62, %55, %69, %2 in 1 : vector<32x32xf32>, vector<32x32xf32>, vector<32x32xf32>, vector<32x17xf32> -> vector<32x113xf32>
    %c1 = arith.constant 1 : index
    %c0_21 = arith.constant 0 : index
    %c0_22 = arith.constant 0 : index
    %71 = vector.load %arg2[%c1, %c0_21, %c0_22] : memref<3x113x64xf32, #tpu.memory_space<vmem>>, vector<1x113x64xf32>
    %72 = vector.shape_cast %71 : vector<1x113x64xf32> to vector<113x64xf32>
    %cst_23 = arith.constant dense<0.000000e+00> : vector<32x64xf32>
    %73 = tpu.matmul %70, %72, %cst_23 {dimension_numbers = #tpu.dot_dimension_numbers<[1], [0], [0], [1], [0, 0, 1, 1], [], []>} : vector<32x113xf32>, vector<113x64xf32>, vector<32x64xf32> -> vector<32x64xf32>
    %74 = vector.extract_strided_slice %73 {offsets = [0, 0], sizes = [32, 32], strides = [1, 1]} : vector<32x64xf32> to vector<32x32xf32>
    %75 = math.tanh %74 : vector<32x32xf32>
    %76 = vector.extract_strided_slice %73 {offsets = [0, 32], sizes = [32, 32], strides = [1, 1]} : vector<32x64xf32> to vector<32x32xf32>
    %77 = arith.negf %76 : vector<32x32xf32>
    %78 = math.exp %77 : vector<32x32xf32>
    %cst_24 = arith.constant 1.000000e+00 : f32
    %79 = vector.broadcast %cst_24 : f32 to vector<32x32xf32>
    %80 = arith.addf %79, %78 : vector<32x32xf32>
    %81 = arith.divf %79, %80 : vector<32x32xf32>
    %82 = arith.mulf %75, %81 : vector<32x32xf32>
    %83 = tpu.concatenate %82, %0 in 1 : vector<32x32xf32>, vector<32x1xf32> -> vector<32x33xf32>
    %c1_25 = arith.constant 1 : index
    %c0_26 = arith.constant 0 : index
    %c0_27 = arith.constant 0 : index
    %84 = vector.load %arg3[%c1_25, %c0_26, %c0_27] : memref<3x33x64xf32, #tpu.memory_space<vmem>>, vector<1x33x64xf32>
    %85 = vector.shape_cast %84 : vector<1x33x64xf32> to vector<33x64xf32>
    %cst_28 = arith.constant dense<0.000000e+00> : vector<32x64xf32>
    %86 = tpu.matmul %83, %85, %cst_28 {dimension_numbers = #tpu.dot_dimension_numbers<[1], [0], [0], [1], [0, 0, 1, 1], [], []>} : vector<32x33xf32>, vector<33x64xf32>, vector<32x64xf32> -> vector<32x64xf32>
    %87 = arith.addf %53, %86 : vector<32x64xf32>
    %88 = vector.extract_strided_slice %86 {offsets = [0, 0], sizes = [32, 32], strides = [1, 1]} : vector<32x64xf32> to vector<32x32xf32>
    %89 = arith.addf %55, %88 : vector<32x32xf32>
    %c4_i32 = arith.constant 4 : i32
    %90 = vector.broadcast %c4_i32 : i32 to vector<32x32xi32>
    %91 = arith.cmpi sge, %19, %90 : vector<32x32xi32>
    %92 = vector.extract_strided_slice %89 {offsets = [28, 0], sizes = [4, 32], strides = [1, 1]} : vector<32x32xf32> to vector<4x32xf32>
    %93 = vector.extract_strided_slice %89 {offsets = [0, 0], sizes = [28, 32], strides = [1, 1]} : vector<32x32xf32> to vector<28x32xf32>
    %94 = tpu.concatenate %92, %93 in 0 : vector<4x32xf32>, vector<28x32xf32> -> vector<32x32xf32>
    %cst_29 = arith.constant 0.000000e+00 : f32
    %95 = vector.broadcast %cst_29 : f32 to vector<32x32xf32>
    %96 = arith.select %91, %94, %95 : vector<32x32xi1>, vector<32x32xf32>
    %c12_i32 = arith.constant 12 : i32
    %97 = vector.broadcast %c12_i32 : i32 to vector<32x32xi32>
    %98 = arith.cmpi slt, %19, %97 : vector<32x32xi32>
    %99 = vector.extract_strided_slice %89 {offsets = [4, 0], sizes = [28, 32], strides = [1, 1]} : vector<32x32xf32> to vector<28x32xf32>
    %100 = vector.extract_strided_slice %89 {offsets = [0, 0], sizes = [4, 32], strides = [1, 1]} : vector<32x32xf32> to vector<4x32xf32>
    %101 = tpu.concatenate %99, %100 in 0 : vector<28x32xf32>, vector<4x32xf32> -> vector<32x32xf32>
    %cst_30 = arith.constant 0.000000e+00 : f32
    %102 = vector.broadcast %cst_30 : f32 to vector<32x32xf32>
    %103 = arith.select %98, %101, %102 : vector<32x32xi1>, vector<32x32xf32>
    %104 = tpu.concatenate %96, %89, %103, %2 in 1 : vector<32x32xf32>, vector<32x32xf32>, vector<32x32xf32>, vector<32x17xf32> -> vector<32x113xf32>
    %c2 = arith.constant 2 : index
    %c0_31 = arith.constant 0 : index
    %c0_32 = arith.constant 0 : index
    %105 = vector.load %arg2[%c2, %c0_31, %c0_32] : memref<3x113x64xf32, #tpu.memory_space<vmem>>, vector<1x113x64xf32>
    %106 = vector.shape_cast %105 : vector<1x113x64xf32> to vector<113x64xf32>
    %cst_33 = arith.constant dense<0.000000e+00> : vector<32x64xf32>
    %107 = tpu.matmul %104, %106, %cst_33 {dimension_numbers = #tpu.dot_dimension_numbers<[1], [0], [0], [1], [0, 0, 1, 1], [], []>} : vector<32x113xf32>, vector<113x64xf32>, vector<32x64xf32> -> vector<32x64xf32>
    %108 = vector.extract_strided_slice %107 {offsets = [0, 0], sizes = [32, 32], strides = [1, 1]} : vector<32x64xf32> to vector<32x32xf32>
    %109 = math.tanh %108 : vector<32x32xf32>
    %110 = vector.extract_strided_slice %107 {offsets = [0, 32], sizes = [32, 32], strides = [1, 1]} : vector<32x64xf32> to vector<32x32xf32>
    %111 = arith.negf %110 : vector<32x32xf32>
    %112 = math.exp %111 : vector<32x32xf32>
    %cst_34 = arith.constant 1.000000e+00 : f32
    %113 = vector.broadcast %cst_34 : f32 to vector<32x32xf32>
    %114 = arith.addf %113, %112 : vector<32x32xf32>
    %115 = arith.divf %113, %114 : vector<32x32xf32>
    %116 = arith.mulf %109, %115 : vector<32x32xf32>
    %117 = tpu.concatenate %116, %0 in 1 : vector<32x32xf32>, vector<32x1xf32> -> vector<32x33xf32>
    %c2_35 = arith.constant 2 : index
    %c0_36 = arith.constant 0 : index
    %c0_37 = arith.constant 0 : index
    %118 = vector.load %arg3[%c2_35, %c0_36, %c0_37] : memref<3x33x64xf32, #tpu.memory_space<vmem>>, vector<1x33x64xf32>
    %119 = vector.shape_cast %118 : vector<1x33x64xf32> to vector<33x64xf32>
    %cst_38 = arith.constant dense<0.000000e+00> : vector<32x64xf32>
    %120 = tpu.matmul %117, %119, %cst_38 {dimension_numbers = #tpu.dot_dimension_numbers<[1], [0], [0], [1], [0, 0, 1, 1], [], []>} : vector<32x33xf32>, vector<33x64xf32>, vector<32x64xf32> -> vector<32x64xf32>
    %121 = arith.addf %87, %120 : vector<32x64xf32>
    %122 = vector.extract_strided_slice %121 {offsets = [0, 32], sizes = [32, 32], strides = [1, 1]} : vector<32x64xf32> to vector<32x32xf32>
    %c0_39 = arith.constant 0 : index
    %c0_40 = arith.constant 0 : index
    %123 = vector.load %arg4[%c0_39, %c0_40] : memref<32x32xf32, #tpu.memory_space<vmem>>, vector<32x32xf32>
    tpu.vector_store %arg4[%c0_39, %c0_40], %122 {strides = array<i32>} : memref<32x32xf32, #tpu.memory_space<vmem>>, vector<32x32xf32>,
    return
  }
}

</mosaic_0001>

<llo_original>
// kernel: wn_forward.1
$region0: #{wn_forward.1}
  #allocation0 [shape = 'u32[]', space=smem, size = 0x4, offset = 0x4, fixed_abs, tag = 'smem constant byte address 0x4 - core index']
  #allocation1 [shape = 'u32[144,128]{1,0:T(1,128)}', space=vmem, size = 0x12000, scoped, tag = 'internal scratch']
  %s0 = inlined_call_operand.vmem [shape: f32[32,32], index: 0, kind: input, shape index: {}]
  %s1 = inlined_call_operand.vmem [shape: f32[32,16], index: 1, kind: input, shape index: {}]
  %s2 = inlined_call_operand.vmem [shape: f32[3,113,64], index: 2, kind: input, shape index: {}]
  %s3 = inlined_call_operand.vmem [shape: f32[3,33,64], index: 3, kind: input, shape index: {}]
  %s4 = inlined_call_operand.hbm [shape: f32[32,32], index: 4, kind: output, shape index: {}]
  %s5 = sld [smem:[#allocation0]]
  $region26: #{wn_forward.1} parent=0
    _
  %s7 = ssub.s32 1, %s5
  %s8 = scalar_select 0, %s7, %s5
  $region1: #{wn_forward.1} parent=0
    #allocation2 [shape = 'u8[16384]{0}', space=vmem, size = 0x4000, scoped, tag = 'output window, operand 0, single buffered']
    #allocation3 [shape = 's32[1]{0}', space=sflag, size = 0x4, scoped, tag = 'scoped memory for wn_forward.1']
    %9 = vsyncpa [#allocation3], 0
    // Predicated region
    $region2: #{wn_forward.1} parent=1 // pred_check
      _
    $region3: #{wn_forward.1} parent=1 // pred_check_branch
      %11 = sbr.rel (0) target = $region5
    $region4: #{wn_forward.1} parent=1 // pred_region
      _
    $region5: #{wn_forward.1} parent=1 // pred_fallthru
      _
    // Predicated region
    $region6: #{wn_forward.1} parent=1 // pred_check
      _
    $region7: #{wn_forward.1} parent=1 // pred_check_branch
      %13 = sbr.rel (0) target = $region9
    $region8: #{wn_forward.1} parent=1 // pred_region
      _
    $region9: #{wn_forward.1} parent=1 // pred_fallthru
      _
    // Predicated region
    $region10: #{wn_forward.1} parent=1 // pred_check
      _
    $region11: #{wn_forward.1} parent=1 // pred_check_branch
      %15 = sbr.rel (0) target = $region13
    $region12: #{wn_forward.1} parent=1 // pred_region
      _
    $region13: #{wn_forward.1} parent=1 // pred_fallthru
      _
    // Predicated region
    $region14: #{wn_forward.1} parent=1 // pred_check
      _
    $region15: #{wn_forward.1} parent=1 // pred_check_branch
      %17 = sbr.rel (0) target = $region17
    $region16: #{wn_forward.1} parent=1 // pred_region
      _
    $region17: #{wn_forward.1} parent=1 // pred_fallthru
      _
    %v18 = vld [vmem:[%s1] sm:$0xff]
    %v19 = vld [vmem:[%s1 + $0x8] sm:$0xff]
    %v20 = vld [vmem:[%s1 + $0x10] sm:$0xff]
    %v21 = vld [vmem:[%s1 + $0x18] sm:$0xff]
    %vm22 = vcmask 130048
    %v23 = vsel %vm22, %v18, 1.0
    %v24 = vsel %vm22, %v19, 1.0
    %v25 = vsel %vm22, %v20, 1.0
    %v26 = vsel %vm22, %v21, 1.0
    %v27 = vlaneseq
    %v28 = vshrl.u32 %v27, 7
    %v29 = vadd.s32 %v28, 8
    %v30 = vadd.s32 %v28, 16
    %v31 = vadd.s32 %v28, 24
    %vm32 = vcmp.lt.s32.totalorder %v28, 0
    %v33 = vsub.s32 0, %v28
    %v34 = vsel %vm32, %v33, %v28
    %v35 = vshrl.u32 %v34, 4
    %v36 = vand.u32 %v34, 15
    %v37 = vsub.s32 0, %v36
    %v38 = vsel %vm32, %v37, %v36
    %vm39 = vcmp.lt.s32.totalorder %v29, 0
    %v40 = vsub.s32 0, %v29
    %v41 = vsel %vm39, %v40, %v29
    %v42 = vshrl.u32 %v41, 4
    %v43 = vand.u32 %v41, 15
    %v44 = vsub.s32 0, %v43
    %v45 = vsel %vm39, %v44, %v43
    %vm46 = vcmp.lt.s32.totalorder %v30, 0
    %v47 = vsub.s32 0, %v30
    %v48 = vsel %vm46, %v47, %v30
    %v49 = vshrl.u32 %v48, 4
    %v50 = vand.u32 %v48, 15
    %v51 = vsub.s32 0, %v50
    %v52 = vsel %vm46, %v51, %v50
    %vm53 = vcmp.lt.s32.totalorder %v31, 0
    %v54 = vsub.s32 0, %v31
    %v55 = vsel %vm53, %v54, %v31
    %v56 = vshrl.u32 %v55, 4
    %v57 = vand.u32 %v55, 15
    %v58 = vsub.s32 0, %v57
    %v59 = vsel %vm53, %v58, %v57
    %vm60 = vcmp.ne.s32.totalorder %v38, 0
    %vm61 = vcmp.ne.s32.totalorder %v45, 0
    %vm62 = vcmp.ne.s32.totalorder %v52, 0
    %vm63 = vcmp.ne.s32.totalorder %v59, 0
    %vm64 = vcmp.lt.s32.totalorder %v38, 0
    %vm65 = vcmp.lt.s32.totalorder %v45, 0
    %vm66 = vcmp.lt.s32.totalorder %v52, 0
    %vm67 = vcmp.lt.s32.totalorder %v59, 0
    %vm68 = vmand %vm64, %vm60
    %vm69 = vmand %vm65, %vm61
    %vm70 = vmand %vm66, %vm62
    %vm71 = vmand %vm67, %vm63
    %v72 = vadd.s32 %v38, 16
    %v73 = vadd.s32 %v45, 16
    %v74 = vadd.s32 %v52, 16
    %v75 = vadd.s32 %v59, 16
    %v76 = vsel %vm68, %v72, %v38
    %v77 = vsel %vm69, %v73, %v45
    %v78 = vsel %vm70, %v74, %v52
    %v79 = vsel %vm71, %v75, %v59
    %v80 = vld [vmem:[%s0] sm:$0xff]
    %v81 = vld [vmem:[%s0 + $0x8] sm:$0xff]
    %v82 = vld [vmem:[%s0 + $0x10] sm:$0xff]
    %v83 = vld [vmem:[%s0 + $0x18] sm:$0xff]
    %vm84 = vcmp.ge.s32.totalorder %v76, 1
    %vm85 = vcmp.ge.s32.totalorder %v77, 1
    %vm86 = vcmp.ge.s32.totalorder %v78, 1
    %vm87 = vcmp.ge.s32.totalorder %v79, 1
    %v89 = vrot.slane %v83, 7
    %vm94 = vcmask 1040384
    %v95 = vrot.slane %v80, 7
    %v96 = vrot.slane %v81, 7
    %v97 = vsel %vm94, %v95, %v96
    %v98 = vrot.slane %v82, 7
    %v99 = vsel %vm94, %v96, %v98
    %v100 = vsel %vm94, %v98, %v89
    %v105 = vsel %vm94, %v89, %v95
    %v106 = vsel %vm84, %v105, 0.0
    %v107 = vsel %vm85, %v97, 0.0
    %v108 = vsel %vm86, %v99, 0.0
    %v109 = vsel %vm87, %v100, 0.0
    %vm110 = vcmp.lt.s32.totalorder %v76, 15
    %vm111 = vcmp.lt.s32.totalorder %v77, 15
    %vm112 = vcmp.lt.s32.totalorder %v78, 15
    %vm113 = vcmp.lt.s32.totalorder %v79, 15
    %vm114 = vcmask 1046528
    %v115 = vrot.slane %v80, 1
    %v116 = vrot.slane %v81, 1
    %v117 = vsel %vm114, %v115, %v116
    %v118 = vrot.slane %v82, 1
    %v119 = vsel %vm114, %v116, %v118
    %v120 = vrot.slane %v83, 1
    %v121 = vsel %vm114, %v118, %v120
    %v127 = vsel %vm114, %v120, %v115
    %v128 = vsel %vm110, %v117, 0.0
    %v129 = vsel %vm111, %v119, 0.0
    %v130 = vsel %vm112, %v121, 0.0
    %v131 = vsel %vm113, %v127, 0.0
    %132 = vrot.lane.b32.xlu0 %v80, 32
    %v133 = vpop.permute.xlu0 %132
    %134 = vrot.lane.b32.xlu0 %v81, 32
    %v135 = vpop.permute.xlu0 %134
    %136 = vrot.lane.b32.xlu0 %v82, 32
    %v137 = vpop.permute.xlu0 %136
    %138 = vrot.lane.b32.xlu0 %v83, 32
    %v139 = vpop.permute.xlu0 %138
    %148 = vrot.lane.b32.xlu0 %v128, 64
    %v149 = vpop.permute.xlu0 %148
    %150 = vrot.lane.b32.xlu0 %v129, 64
    %v151 = vpop.permute.xlu0 %150
    %152 = vrot.lane.b32.xlu0 %v130, 64
    %v153 = vpop.permute.xlu0 %152
    %154 = vrot.lane.b32.xlu0 %v131, 64
    %v155 = vpop.permute.xlu0 %154
    %164 = vrot.lane.b32.xlu0 %v23, 96
    %v165 = vpop.permute.xlu0 %164
    %166 = vrot.lane.b32.xlu0 %v24, 96
    %v167 = vpop.permute.xlu0 %166
    %168 = vrot.lane.b32.xlu0 %v25, 96
    %v169 = vpop.permute.xlu0 %168
    %170 = vrot.lane.b32.xlu0 %v26, 96
    %v171 = vpop.permute.xlu0 %170
    %vm176 = vcmask 261120
    %v177 = vsel %vm176, %v106, %v133
    %v178 = vsel %vm176, %v107, %v135
    %v179 = vsel %vm176, %v108, %v137
    %v180 = vsel %vm176, %v109, %v139
    %vm181 = vcmask 523264
    %v182 = vsel %vm181, %v177, %v149
    %v183 = vsel %vm181, %v178, %v151
    %v184 = vsel %vm181, %v179, %v153
    %v185 = vsel %vm181, %v180, %v155
    %vm186 = vcmask 785408
    %v187 = vsel %vm186, %v182, %v165
    %v188 = vsel %vm186, %v183, %v167
    %v189 = vsel %vm186, %v184, %v169
    %v190 = vsel %vm186, %v185, %v171
    %v191 = vld [vmem:[%s2] sm:$0xff]
    %v192 = vld [vmem:[%s2 + $0x8] sm:$0xff]
    %v193 = vld [vmem:[%s2 + $0x10] sm:$0xff]
    %v194 = vld [vmem:[%s2 + $0x18] sm:$0xff]
    %v195 = vld [vmem:[%s2 + $0x20] sm:$0xff]
    %v196 = vld [vmem:[%s2 + $0x28] sm:$0xff]
    %v197 = vld [vmem:[%s2 + $0x30] sm:$0xff]
    %v198 = vld [vmem:[%s2 + $0x38] sm:$0xff]
    %v199 = vld [vmem:[%s2 + $0x40] sm:$0xff]
    %v200 = vld [vmem:[%s2 + $0x48] sm:$0xff]
    %v201 = vld [vmem:[%s2 + $0x50] sm:$0xff]
    %v202 = vld [vmem:[%s2 + $0x58] sm:$0xff]
    %v203 = vld [vmem:[%s2 + $0x60] sm:$0xff]
    %v204 = vld [vmem:[%s2 + $0x68] sm:$0xff]
    %v205 = vld [vmem:[%s2 + $0x70] sm:$0x1]
    %vm206 = vcmask 924672
    %v208 = vsel %vm206, %v187, 0
    %v211 = vsel %vm206, %v188, 0
    %v214 = vsel %vm206, %v189, 0
    %v217 = vsel %vm206, %v190, 0
    %v220 = vsel %vm94, %v205, 0
    %222 = vmatprep.subr.mxu0 0.0
    %223 = vmatpush1.msra.mxu0 0.0
    %224 = vmatprep.subr.mxu0 0.0
    %225 = vmatpush1.msra.mxu0 %v220
    %226 = vmatprep.subr.mxu0 0.0
    %227 = vmatpush1.msra.mxu0 %v204
    %228 = vmatprep.subr.mxu0 0.0
    %229 = vmatpush1.msra.mxu0 %v203
    %230 = vmatprep.subr.mxu0 0.0
    %231 = vmatpush1.msra.mxu0 %v202
    %232 = vmatprep.subr.mxu0 0.0
    %233 = vmatpush1.msra.mxu0 %v201
    %234 = vmatprep.subr.mxu0 0.0
    %235 = vmatpush1.msra.mxu0 %v200
    %236 = vmatprep.subr.mxu0 0.0
    %237 = vmatpush1.msra.mxu0 %v199
    %238 = vmatprep.subr.mxu0 0.0
    %239 = vmatpush1.msra.mxu0 %v198
    %240 = vmatprep.subr.mxu0 0.0
    %241 = vmatpush1.msra.mxu0 %v197
    %242 = vmatprep.subr.mxu0 0.0
    %243 = vmatpush1.msra.mxu0 %v196
    %244 = vmatprep.subr.mxu0 0.0
    %245 = vmatpush1.msra.mxu0 %v195
    %246 = vmatprep.subr.mxu0 0.0
    %247 = vmatpush1.msra.mxu0 %v194
    %248 = vmatprep.subr.mxu0 0.0
    %249 = vmatpush1.msra.mxu0 %v193
    %250 = vmatprep.subr.mxu0 0.0
    %251 = vmatpush1.msra.mxu0 %v192
    %252 = vmatprep.subr.mxu0 0.0
    %253 = vmatpush1.msra.mxu0 %v191
    %254 = vmatprep.subr.mxu0 0.0
    %255 = vmatpush2.msra.mxu0 0.0
    %256 = vmatprep.subr.mxu0 0.0
    %257 = vmatpush2.msra.mxu0 0.0
    %258 = vmatprep.subr.mxu0 0.0
    %259 = vmatpush2.msra.mxu0 0.0
    %260 = vmatprep.subr.mxu0 0.0
    %261 = vmatpush2.msra.mxu0 0.0
    %262 = vmatprep.subr.mxu0 0.0
    %263 = vmatpush2.msra.mxu0 0.0
    %264 = vmatprep.subr.mxu0 0.0
    %265 = vmatpush2.msra.mxu0 0.0
    %266 = vmatprep.subr.mxu0 0.0
    %267 = vmatpush2.msra.mxu0 0.0
    %268 = vmatprep.subr.mxu0 0.0
    %269 = vmatpush2.msra.mxu0 0.0
    %270 = vmatprep.subr.mxu0 0.0
    %271 = vmatpush2.msra.mxu0 0.0
    %272 = vmatprep.subr.mxu0 0.0
    %273 = vmatpush2.msra.mxu0 0.0
    %274 = vmatprep.subr.mxu0 0.0
    %275 = vmatpush2.msra.mxu0 0.0
    %276 = vmatprep.subr.mxu0 0.0
    %277 = vmatpush2.msra.mxu0 0.0
    %278 = vmatprep.subr.mxu0 0.0
    %279 = vmatpush2.msra.mxu0 0.0
    %280 = vmatprep.subr.mxu0 0.0
    %281 = vmatpush2.msra.mxu0 0.0
    %282 = vmatprep.subr.mxu0 0.0
    %283 = vmatpush2.msra.mxu0 0.0
    %284 = vmatprep.subr.mxu0 0.0
    %285 = vmatpush2.msra.mxu0 0.0
    %286 = vmatprep.mubr.f32.mxu0 0.0
    %287 = vmatmul.mubr.f32.gmra.mxu0 %v208
    %v288 = vpop.f32.mrf.mxu0
    %v289 = vadd.f32 0.0, %v288
    %v290 = vpop.f32.mrf.mxu0
    %291 = vmatprep.mubr.f32.mxu0 0.0
    %292 = vmatmul.mubr.f32.gmra.mxu0 %v211
    %v293 = vpop.f32.mrf.mxu0
    %v294 = vadd.f32 0.0, %v293
    %v295 = vpop.f32.mrf.mxu0
    %296 = vmatprep.mubr.f32.mxu0 0.0
    %297 = vmatmul.mubr.f32.gmra.mxu0 %v214
    %v298 = vpop.f32.mrf.mxu0
    %v299 = vadd.f32 0.0, %v298
    %v300 = vpop.f32.mrf.mxu0
    %301 = vmatprep.mubr.f32.mxu0 0.0
    %302 = vmatmul.mubr.f32.gmra.mxu0 %v217
    %v303 = vpop.f32.mrf.mxu0
    %v304 = vadd.f32 0.0, %v303
    %v305 = vpop.f32.mrf.mxu0
    %306 = vdwg.mxu0
    %v307 = vtanh.pop %v289
    %v308 = vtanh.pop %v294
    %v309 = vtanh.pop %v299
    %v310 = vtanh.pop %v304
    %v311 = vxor.u32 %v289, 2147483648
    %v312 = vxor.u32 %v294, 2147483648
    %v313 = vxor.u32 %v299, 2147483648
    %v314 = vxor.u32 %v304, 2147483648
    %v315 = vmul.f32 %v311, 1.442695
    %v316 = vpow.pop %v315
    %v317 = vmul.f32 %v312, 1.442695
    %v318 = vpow.pop %v317
    %v319 = vmul.f32 %v313, 1.442695
    %v320 = vpow.pop %v319
    %v321 = vmul.f32 %v314, 1.442695
    %v322 = vpow.pop %v321
    %v323 = vadd.f32 %v316, 1.0
    %v324 = vadd.f32 %v318, 1.0
    %v325 = vadd.f32 %v320, 1.0
    %v326 = vadd.f32 %v322, 1.0
    %v327 = vrcp.pop %v323
    %v328 = vmul.f32 1.0, %v327
    %v329 = vrcp.pop %v324
    %v330 = vmul.f32 1.0, %v329
    %v331 = vrcp.pop %v325
    %v332 = vmul.f32 1.0, %v331
    %v333 = vrcp.pop %v326
    %v334 = vmul.f32 1.0, %v333
    %339 = vrot.lane.b32.xlu0 %v328, 96
    %v340 = vpop.permute.xlu0 %339
    %341 = vrot.lane.b32.xlu0 %v330, 96
    %v342 = vpop.permute.xlu0 %341
    %343 = vrot.lane.b32.xlu0 %v332, 96
    %v344 = vpop.permute.xlu0 %343
    %345 = vrot.lane.b32.xlu0 %v334, 96
    %v346 = vpop.permute.xlu0 %345
    %v351 = vmul.f32 %v307, %v340
    %v352 = vmul.f32 %v308, %v342
    %v353 = vmul.f32 %v309, %v344
    %v354 = vmul.f32 %v310, %v346
    %v355 = vsel %vm176, %v351, 1.0
    %v356 = vsel %vm176, %v352, 1.0
    %v357 = vsel %vm176, %v353, 1.0
    %v358 = vsel %vm176, %v354, 1.0
    %v359 = vld [vmem:[%s3] sm:$0xff]
    %v360 = vld [vmem:[%s3 + $0x8] sm:$0xff]
    %v361 = vld [vmem:[%s3 + $0x10] sm:$0xff]
    %v362 = vld [vmem:[%s3 + $0x18] sm:$0xff]
    %v363 = vld [vmem:[%s3 + $0x20] sm:$0x1]
    %vm364 = vcmask 269312
    %v366 = vsel %vm364, %v355, 0
    %v369 = vsel %vm364, %v356, 0
    %v372 = vsel %vm364, %v357, 0
    %v375 = vsel %vm364, %v358, 0
    %v378 = vsel %vm94, %v363, 0
    %380 = vmatprep.subr.mxu0 0.0
    %381 = vmatpush1.msra.mxu0 0.0
    %382 = vmatprep.subr.mxu0 0.0
    %383 = vmatpush1.msra.mxu0 0.0
    %384 = vmatprep.subr.mxu0 0.0
    %385 = vmatpush1.msra.mxu0 0.0
    %386 = vmatprep.subr.mxu0 0.0
    %387 = vmatpush1.msra.mxu0 0.0
    %388 = vmatprep.subr.mxu0 0.0
    %389 = vmatpush1.msra.mxu0 0.0
    %390 = vmatprep.subr.mxu0 0.0
    %391 = vmatpush1.msra.mxu0 0.0
    %392 = vmatprep.subr.mxu0 0.0
    %393 = vmatpush1.msra.mxu0 0.0
    %394 = vmatprep.subr.mxu0 0.0
    %395 = vmatpush1.msra.mxu0 0.0
    %396 = vmatprep.subr.mxu0 0.0
    %397 = vmatpush1.msra.mxu0 0.0
    %398 = vmatprep.subr.mxu0 0.0
    %399 = vmatpush1.msra.mxu0 0.0
    %400 = vmatprep.subr.mxu0 0.0
    %401 = vmatpush1.msra.mxu0 0.0
    %402 = vmatprep.subr.mxu0 0.0
    %403 = vmatpush1.msra.mxu0 %v378
    %404 = vmatprep.subr.mxu0 0.0
    %405 = vmatpush1.msra.mxu0 %v362
    %406 = vmatprep.subr.mxu0 0.0
    %407 = vmatpush1.msra.mxu0 %v361
    %408 = vmatprep.subr.mxu0 0.0
    %409 = vmatpush1.msra.mxu0 %v360
    %410 = vmatprep.subr.mxu0 0.0
    %411 = vmatpush1.msra.mxu0 %v359
    %412 = vmatprep.subr.mxu0 0.0
    %413 = vmatpush2.msra.mxu0 0.0
    %414 = vmatprep.subr.mxu0 0.0
    %415 = vmatpush2.msra.mxu0 0.0
    %416 = vmatprep.subr.mxu0 0.0
    %417 = vmatpush2.msra.mxu0 0.0
    %418 = vmatprep.subr.mxu0 0.0
    %419 = vmatpush2.msra.mxu0 0.0
    %420 = vmatprep.subr.mxu0 0.0
    %421 = vmatpush2.msra.mxu0 0.0
    %422 = vmatprep.subr.mxu0 0.0
    %423 = vmatpush2.msra.mxu0 0.0
    %424 = vmatprep.subr.mxu0 0.0
    %425 = vmatpush2.msra.mxu0 0.0
    %426 = vmatprep.subr.mxu0 0.0
    %427 = vmatpush2.msra.mxu0 0.0
    %428 = vmatprep.subr.mxu0 0.0
    %429 = vmatpush2.msra.mxu0 0.0
    %430 = vmatprep.subr.mxu0 0.0
    %431 = vmatpush2.msra.mxu0 0.0
    %432 = vmatprep.subr.mxu0 0.0
    %433 = vmatpush2.msra.mxu0 0.0
    %434 = vmatprep.subr.mxu0 0.0
    %435 = vmatpush2.msra.mxu0 0.0
    %436 = vmatprep.subr.mxu0 0.0
    %437 = vmatpush2.msra.mxu0 0.0
    %438 = vmatprep.subr.mxu0 0.0
    %439 = vmatpush2.msra.mxu0 0.0
    %440 = vmatprep.subr.mxu0 0.0
    %441 = vmatpush2.msra.mxu0 0.0
    %442 = vmatprep.subr.mxu0 0.0
    %443 = vmatpush2.msra.mxu0 0.0
    %444 = vmatprep.mubr.f32.mxu0 0.0
    %445 = vmatmul.mubr.f32.gmra.mxu0 %v366
    %v446 = vpop.f32.mrf.mxu0
    %v447 = vadd.f32 0.0, %v446
    %v448 = vpop.f32.mrf.mxu0
    %449 = vmatprep.mubr.f32.mxu0 0.0
    %450 = vmatmul.mubr.f32.gmra.mxu0 %v369
    %v451 = vpop.f32.mrf.mxu0
    %v452 = vadd.f32 0.0, %v451
    %v453 = vpop.f32.mrf.mxu0
    %454 = vmatprep.mubr.f32.mxu0 0.0
    %455 = vmatmul.mubr.f32.gmra.mxu0 %v372
    %v456 = vpop.f32.mrf.mxu0
    %v457 = vadd.f32 0.0, %v456
    %v458 = vpop.f32.mrf.mxu0
    %459 = vmatprep.mubr.f32.mxu0 0.0
    %460 = vmatmul.mubr.f32.gmra.mxu0 %v375
    %v461 = vpop.f32.mrf.mxu0
    %v462 = vadd.f32 0.0, %v461
    %v463 = vpop.f32.mrf.mxu0
    %464 = vdwg.mxu0
    %v465 = vadd.f32 %v447, 0.0
    %v466 = vadd.f32 %v452, 0.0
    %v467 = vadd.f32 %v457, 0.0
    %v468 = vadd.f32 %v462, 0.0
    %v469 = vadd.f32 %v80, %v447
    %v470 = vadd.f32 %v81, %v452
    %v471 = vadd.f32 %v82, %v457
    %v472 = vadd.f32 %v83, %v462
    %vm473 = vcmp.ge.s32.totalorder %v76, 2
    %vm474 = vcmp.ge.s32.totalorder %v77, 2
    %vm475 = vcmp.ge.s32.totalorder %v78, 2
    %vm476 = vcmp.ge.s32.totalorder %v79, 2
    %v478 = vrot.slane %v472, 6
    %vm483 = vcmask 1041408
    %v484 = vrot.slane %v469, 6
    %v485 = vrot.slane %v470, 6
    %v486 = vsel %vm483, %v484, %v485
    %v487 = vrot.slane %v471, 6
    %v488 = vsel %vm483, %v485, %v487
    %v489 = vsel %vm483, %v487, %v478
    %v494 = vsel %vm483, %v478, %v484
    %v495 = vsel %vm473, %v494, 0.0
    %v496 = vsel %vm474, %v486, 0.0
    %v497 = vsel %vm475, %v488, 0.0
    %v498 = vsel %vm476, %v489, 0.0
    %vm499 = vcmp.lt.s32.totalorder %v76, 14
    %vm500 = vcmp.lt.s32.totalorder %v77, 14
    %vm501 = vcmp.lt.s32.totalorder %v78, 14
    %vm502 = vcmp.lt.s32.totalorder %v79, 14
    %vm503 = vcmask 1045504
    %v504 = vrot.slane %v469, 2
    %v505 = vrot.slane %v470, 2
    %v506 = vsel %vm503, %v504, %v505
    %v507 = vrot.slane %v471, 2
    %v508 = vsel %vm503, %v505, %v507
    %v509 = vrot.slane %v472, 2
    %v510 = vsel %vm503, %v507, %v509
    %v516 = vsel %vm503, %v509, %v504
    %v517 = vsel %vm499, %v506, 0.0
    %v518 = vsel %vm500, %v508, 0.0
    %v519 = vsel %vm501, %v510, 0.0
    %v520 = vsel %vm502, %v516, 0.0
    %521 = vrot.lane.b32.xlu0 %v469, 32
    %v522 = vpop.permute.xlu0 %521
    %523 = vrot.lane.b32.xlu0 %v470, 32
    %v524 = vpop.permute.xlu0 %523
    %525 = vrot.lane.b32.xlu0 %v471, 32
    %v526 = vpop.permute.xlu0 %525
    %527 = vrot.lane.b32.xlu0 %v472, 32
    %v528 = vpop.permute.xlu0 %527
    %537 = vrot.lane.b32.xlu0 %v517, 64
    %v538 = vpop.permute.xlu0 %537
    %539 = vrot.lane.b32.xlu0 %v518, 64
    %v540 = vpop.permute.xlu0 %539
    %541 = vrot.lane.b32.xlu0 %v519, 64
    %v542 = vpop.permute.xlu0 %541
    %543 = vrot.lane.b32.xlu0 %v520, 64
    %v544 = vpop.permute.xlu0 %543
    %v549 = vsel %vm176, %v495, %v522
    %v550 = vsel %vm176, %v496, %v524
    %v551 = vsel %vm176, %v497, %v526
    %v552 = vsel %vm176, %v498, %v528
    %v553 = vsel %vm181, %v549, %v538
    %v554 = vsel %vm181, %v550, %v540
    %v555 = vsel %vm181, %v551, %v542
    %v556 = vsel %vm181, %v552, %v544
    %v557 = vsel %vm186, %v553, %v165
    %v558 = vsel %vm186, %v554, %v167
    %v559 = vsel %vm186, %v555, %v169
    %v560 = vsel %vm186, %v556, %v171
    %s561 = scalar_lea.vmem %s2, 120
    %v562 = vld [vmem:[%s561] sm:$0xff]
    %v563 = vld [vmem:[%s561 + $0x8] sm:$0xff]
    %v564 = vld [vmem:[%s561 + $0x10] sm:$0xff]
    %v565 = vld [vmem:[%s561 + $0x18] sm:$0xff]
    %v566 = vld [vmem:[%s561 + $0x20] sm:$0xff]
    %v567 = vld [vmem:[%s561 + $0x28] sm:$0xff]
    %v568 = vld [vmem:[%s561 + $0x30] sm:$0xff]
    %v569 = vld [vmem:[%s561 + $0x38] sm:$0xff]
    %v570 = vld [vmem:[%s561 + $0x40] sm:$0xff]
    %v571 = vld [vmem:[%s561 + $0x48] sm:$0xff]
    %v572 = vld [vmem:[%s561 + $0x50] sm:$0xff]
    %v573 = vld [vmem:[%s561 + $0x58] sm:$0xff]
    %v574 = vld [vmem:[%s561 + $0x60] sm:$0xff]
    %v575 = vld [vmem:[%s561 + $0x68] sm:$0xff]
    %v576 = vld [vmem:[%s561 + $0x70] sm:$0x1]
    %v578 = vsel %vm206, %v557, 0
    %v581 = vsel %vm206, %v558, 0
    %v584 = vsel %vm206, %v559, 0
    %v587 = vsel %vm206, %v560, 0
    %v590 = vsel %vm94, %v576, 0
    %592 = vmatprep.subr.mxu0 0.0
    %593 = vmatpush1.msra.mxu0 0.0
    %594 = vmatprep.subr.mxu0 0.0
    %595 = vmatpush1.msra.mxu0 %v590
    %596 = vmatprep.subr.mxu0 0.0
    %597 = vmatpush1.msra.mxu0 %v575
    %598 = vmatprep.subr.mxu0 0.0
    %599 = vmatpush1.msra.mxu0 %v574
    %600 = vmatprep.subr.mxu0 0.0
    %601 = vmatpush1.msra.mxu0 %v573
    %602 = vmatprep.subr.mxu0 0.0
    %603 = vmatpush1.msra.mxu0 %v572
    %604 = vmatprep.subr.mxu0 0.0
    %605 = vmatpush1.msra.mxu0 %v571
    %606 = vmatprep.subr.mxu0 0.0
    %607 = vmatpush1.msra.mxu0 %v570
    %608 = vmatprep.subr.mxu0 0.0
    %609 = vmatpush1.msra.mxu0 %v569
    %610 = vmatprep.subr.mxu0 0.0
    %611 = vmatpush1.msra.mxu0 %v568
    %612 = vmatprep.subr.mxu0 0.0
    %613 = vmatpush1.msra.mxu0 %v567
    %614 = vmatprep.subr.mxu0 0.0
    %615 = vmatpush1.msra.mxu0 %v566
    %616 = vmatprep.subr.mxu0 0.0
    %617 = vmatpush1.msra.mxu0 %v565
    %618 = vmatprep.subr.mxu0 0.0
    %619 = vmatpush1.msra.mxu0 %v564
    %620 = vmatprep.subr.mxu0 0.0
    %621 = vmatpush1.msra.mxu0 %v563
    %622 = vmatprep.subr.mxu0 0.0
    %623 = vmatpush1.msra.mxu0 %v562
    %624 = vmatprep.subr.mxu0 0.0
    %625 = vmatpush2.msra.mxu0 0.0
    %626 = vmatprep.subr.mxu0 0.0
    %627 = vmatpush2.msra.mxu0 0.0
    %628 = vmatprep.subr.mxu0 0.0
    %629 = vmatpush2.msra.mxu0 0.0
    %630 = vmatprep.subr.mxu0 0.0
    %631 = vmatpush2.msra.mxu0 0.0
    %632 = vmatprep.subr.mxu0 0.0
    %633 = vmatpush2.msra.mxu0 0.0
    %634 = vmatprep.subr.mxu0 0.0
    %635 = vmatpush2.msra.mxu0 0.0
    %636 = vmatprep.subr.mxu0 0.0
    %637 = vmatpush2.msra.mxu0 0.0
    %638 = vmatprep.subr.mxu0 0.0
    %639 = vmatpush2.msra.mxu0 0.0
    %640 = vmatprep.subr.mxu0 0.0
    %641 = vmatpush2.msra.mxu0 0.0
    %642 = vmatprep.subr.mxu0 0.0
    %643 = vmatpush2.msra.mxu0 0.0
    %644 = vmatprep.subr.mxu0 0.0
    %645 = vmatpush2.msra.mxu0 0.0
    %646 = vmatprep.subr.mxu0 0.0
    %647 = vmatpush2.msra.mxu0 0.0
    %648 = vmatprep.subr.mxu0 0.0
    %649 = vmatpush2.msra.mxu0 0.0
    %650 = vmatprep.subr.mxu0 0.0
    %651 = vmatpush2.msra.mxu0 0.0
    %652 = vmatprep.subr.mxu0 0.0
    %653 = vmatpush2.msra.mxu0 0.0
    %654 = vmatprep.subr.mxu0 0.0
    %655 = vmatpush2.msra.mxu0 0.0
    %656 = vmatprep.mubr.f32.mxu0 0.0
    %657 = vmatmul.mubr.f32.gmra.mxu0 %v578
    %v658 = vpop.f32.mrf.mxu0
    %v659 = vadd.f32 0.0, %v658
    %v660 = vpop.f32.mrf.mxu0
    %661 = vmatprep.mubr.f32.mxu0 0.0
    %662 = vmatmul.mubr.f32.gmra.mxu0 %v581
    %v663 = vpop.f32.mrf.mxu0
    %v664 = vadd.f32 0.0, %v663
    %v665 = vpop.f32.mrf.mxu0
    %666 = vmatprep.mubr.f32.mxu0 0.0
    %667 = vmatmul.mubr.f32.gmra.mxu0 %v584
    %v668 = vpop.f32.mrf.mxu0
    %v669 = vadd.f32 0.0, %v668
    %v670 = vpop.f32.mrf.mxu0
    %671 = vmatprep.mubr.f32.mxu0 0.0
    %672 = vmatmul.mubr.f32.gmra.mxu0 %v587
    %v673 = vpop.f32.mrf.mxu0
    %v674 = vadd.f32 0.0, %v673
    %v675 = vpop.f32.mrf.mxu0
    %676 = vdwg.mxu0
    %v677 = vtanh.pop %v659
    %v678 = vtanh.pop %v664
    %v679 = vtanh.pop %v669
    %v680 = vtanh.pop %v674
    %v681 = vxor.u32 %v659, 2147483648
    %v682 = vxor.u32 %v664, 2147483648
    %v683 = vxor.u32 %v669, 2147483648
    %v684 = vxor.u32 %v674, 2147483648
    %v685 = vmul.f32 %v681, 1.442695
    %v686 = vpow.pop %v685
    %v687 = vmul.f32 %v682, 1.442695
    %v688 = vpow.pop %v687
    %v689 = vmul.f32 %v683, 1.442695
    %v690 = vpow.pop %v689
    %v691 = vmul.f32 %v684, 1.442695
    %v692 = vpow.pop %v691
    %v693 = vadd.f32 %v686, 1.0
    %v694 = vadd.f32 %v688, 1.0
    %v695 = vadd.f32 %v690, 1.0
    %v696 = vadd.f32 %v692, 1.0
    %v697 = vrcp.pop %v693
    %v698 = vmul.f32 1.0, %v697
    %v699 = vrcp.pop %v694
    %v700 = vmul.f32 1.0, %v699
    %v701 = vrcp.pop %v695
    %v702 = vmul.f32 1.0, %v701
    %v703 = vrcp.pop %v696
    %v704 = vmul.f32 1.0, %v703
    %709 = vrot.lane.b32.xlu0 %v698, 96
    %v710 = vpop.permute.xlu0 %709
    %711 = vrot.lane.b32.xlu0 %v700, 96
    %v712 = vpop.permute.xlu0 %711
    %713 = vrot.lane.b32.xlu0 %v702, 96
    %v714 = vpop.permute.xlu0 %713
    %715 = vrot.lane.b32.xlu0 %v704, 96
    %v716 = vpop.permute.xlu0 %715
    %v721 = vmul.f32 %v677, %v710
    %v722 = vmul.f32 %v678, %v712
    %v723 = vmul.f32 %v679, %v714
    %v724 = vmul.f32 %v680, %v716
    %v725 = vsel %vm176, %v721, 1.0
    %v726 = vsel %vm176, %v722, 1.0
    %v727 = vsel %vm176, %v723, 1.0
    %v728 = vsel %vm176, %v724, 1.0
    %s729 = scalar_lea.vmem %s3, 40
    %v730 = vld [vmem:[%s729] sm:$0xff]
    %v731 = vld [vmem:[%s729 + $0x8] sm:$0xff]
    %v732 = vld [vmem:[%s729 + $0x10] sm:$0xff]
    %v733 = vld [vmem:[%s729 + $0x18] sm:$0xff]
    %v734 = vld [vmem:[%s729 + $0x20] sm:$0x1]
    %v736 = vsel %vm364, %v725, 0
    %v739 = vsel %vm364, %v726, 0
    %v742 = vsel %vm364, %v727, 0
    %v745 = vsel %vm364, %v728, 0
    %v748 = vsel %vm94, %v734, 0
    %750 = vmatprep.subr.mxu0 0.0
    %751 = vmatpush1.msra.mxu0 0.0
    %752 = vmatprep.subr.mxu0 0.0
    %753 = vmatpush1.msra.mxu0 0.0
    %754 = vmatprep.subr.mxu0 0.0
    %755 = vmatpush1.msra.mxu0 0.0
    %756 = vmatprep.subr.mxu0 0.0
    %757 = vmatpush1.msra.mxu0 0.0
    %758 = vmatprep.subr.mxu0 0.0
    %759 = vmatpush1.msra.mxu0 0.0
    %760 = vmatprep.subr.mxu0 0.0
    %761 = vmatpush1.msra.mxu0 0.0
    %762 = vmatprep.subr.mxu0 0.0
    %763 = vmatpush1.msra.mxu0 0.0
    %764 = vmatprep.subr.mxu0 0.0
    %765 = vmatpush1.msra.mxu0 0.0
    %766 = vmatprep.subr.mxu0 0.0
    %767 = vmatpush1.msra.mxu0 0.0
    %768 = vmatprep.subr.mxu0 0.0
    %769 = vmatpush1.msra.mxu0 0.0
    %770 = vmatprep.subr.mxu0 0.0
    %771 = vmatpush1.msra.mxu0 0.0
    %772 = vmatprep.subr.mxu0 0.0
    %773 = vmatpush1.msra.mxu0 %v748
    %774 = vmatprep.subr.mxu0 0.0
    %775 = vmatpush1.msra.mxu0 %v733
    %776 = vmatprep.subr.mxu0 0.0
    %777 = vmatpush1.msra.mxu0 %v732
    %778 = vmatprep.subr.mxu0 0.0
    %779 = vmatpush1.msra.mxu0 %v731
    %780 = vmatprep.subr.mxu0 0.0
    %781 = vmatpush1.msra.mxu0 %v730
    %782 = vmatprep.subr.mxu0 0.0
    %783 = vmatpush2.msra.mxu0 0.0
    %784 = vmatprep.subr.mxu0 0.0
    %785 = vmatpush2.msra.mxu0 0.0
    %786 = vmatprep.subr.mxu0 0.0
    %787 = vmatpush2.msra.mxu0 0.0
    %788 = vmatprep.subr.mxu0 0.0
    %789 = vmatpush2.msra.mxu0 0.0
    %790 = vmatprep.subr.mxu0 0.0
    %791 = vmatpush2.msra.mxu0 0.0
    %792 = vmatprep.subr.mxu0 0.0
    %793 = vmatpush2.msra.mxu0 0.0
    %794 = vmatprep.subr.mxu0 0.0
    %795 = vmatpush2.msra.mxu0 0.0
    %796 = vmatprep.subr.mxu0 0.0
    %797 = vmatpush2.msra.mxu0 0.0
    %798 = vmatprep.subr.mxu0 0.0
    %799 = vmatpush2.msra.mxu0 0.0
    %800 = vmatprep.subr.mxu0 0.0
    %801 = vmatpush2.msra.mxu0 0.0
    %802 = vmatprep.subr.mxu0 0.0
    %803 = vmatpush2.msra.mxu0 0.0
    %804 = vmatprep.subr.mxu0 0.0
    %805 = vmatpush2.msra.mxu0 0.0
    %806 = vmatprep.subr.mxu0 0.0
    %807 = vmatpush2.msra.mxu0 0.0
    %808 = vmatprep.subr.mxu0 0.0
    %809 = vmatpush2.msra.mxu0 0.0
    %810 = vmatprep.subr.mxu0 0.0
    %811 = vmatpush2.msra.mxu0 0.0
    %812 = vmatprep.subr.mxu0 0.0
    %813 = vmatpush2.msra.mxu0 0.0
    %814 = vmatprep.mubr.f32.mxu0 0.0
    %815 = vmatmul.mubr.f32.gmra.mxu0 %v736
    %v816 = vpop.f32.mrf.mxu0
    %v817 = vadd.f32 0.0, %v816
    %v818 = vpop.f32.mrf.mxu0
    %819 = vmatprep.mubr.f32.mxu0 0.0
    %820 = vmatmul.mubr.f32.gmra.mxu0 %v739
    %v821 = vpop.f32.mrf.mxu0
    %v822 = vadd.f32 0.0, %v821
    %v823 = vpop.f32.mrf.mxu0
    %824 = vmatprep.mubr.f32.mxu0 0.0
    %825 = vmatmul.mubr.f32.gmra.mxu0 %v742
    %v826 = vpop.f32.mrf.mxu0
    %v827 = vadd.f32 0.0, %v826
    %v828 = vpop.f32.mrf.mxu0
    %829 = vmatprep.mubr.f32.mxu0 0.0
    %830 = vmatmul.mubr.f32.gmra.mxu0 %v745
    %v831 = vpop.f32.mrf.mxu0
    %v832 = vadd.f32 0.0, %v831
    %v833 = vpop.f32.mrf.mxu0
    %834 = vdwg.mxu0
    %v835 = vadd.f32 %v465, %v817
    %v836 = vadd.f32 %v466, %v822
    %v837 = vadd.f32 %v467, %v827
    %v838 = vadd.f32 %v468, %v832
    %v839 = vadd.f32 %v469, %v817
    %v840 = vadd.f32 %v470, %v822
    %v841 = vadd.f32 %v471, %v827
    %v842 = vadd.f32 %v472, %v832
    %vm843 = vcmp.ge.s32.totalorder %v76, 4
    %vm844 = vcmp.ge.s32.totalorder %v77, 4
    %vm845 = vcmp.ge.s32.totalorder %v78, 4
    %vm846 = vcmp.ge.s32.totalorder %v79, 4
    %v848 = vrot.slane %v842, 4
    %vm853 = vcmask 1043456
    %v854 = vrot.slane %v839, 4
    %v855 = vrot.slane %v840, 4
    %v856 = vsel %vm853, %v854, %v855
    %v857 = vrot.slane %v841, 4
    %v858 = vsel %vm853, %v855, %v857
    %v859 = vsel %vm853, %v857, %v848
    %v864 = vsel %vm853, %v848, %v854
    %v865 = vsel %vm843, %v864, 0.0
    %v866 = vsel %vm844, %v856, 0.0
    %v867 = vsel %vm845, %v858, 0.0
    %v868 = vsel %vm846, %v859, 0.0
    %vm869 = vcmp.lt.s32.totalorder %v76, 12
    %vm870 = vcmp.lt.s32.totalorder %v77, 12
    %vm871 = vcmp.lt.s32.totalorder %v78, 12
    %vm872 = vcmp.lt.s32.totalorder %v79, 12
    %v873 = vsel %vm869, %v856, 0.0
    %v874 = vsel %vm870, %v858, 0.0
    %v875 = vsel %vm871, %v859, 0.0
    %v876 = vsel %vm872, %v864, 0.0
    %877 = vrot.lane.b32.xlu0 %v839, 32
    %v878 = vpop.permute.xlu0 %877
    %879 = vrot.lane.b32.xlu0 %v840, 32
    %v880 = vpop.permute.xlu0 %879
    %881 = vrot.lane.b32.xlu0 %v841, 32
    %v882 = vpop.permute.xlu0 %881
    %883 = vrot.lane.b32.xlu0 %v842, 32
    %v884 = vpop.permute.xlu0 %883
    %893 = vrot.lane.b32.xlu0 %v873, 64
    %v894 = vpop.permute.xlu0 %893
    %895 = vrot.lane.b32.xlu0 %v874, 64
    %v896 = vpop.permute.xlu0 %895
    %897 = vrot.lane.b32.xlu0 %v875, 64
    %v898 = vpop.permute.xlu0 %897
    %899 = vrot.lane.b32.xlu0 %v876, 64
    %v900 = vpop.permute.xlu0 %899
    %v905 = vsel %vm176, %v865, %v878
    %v906 = vsel %vm176, %v866, %v880
    %v907 = vsel %vm176, %v867, %v882
    %v908 = vsel %vm176, %v868, %v884
    %v909 = vsel %vm181, %v905, %v894
    %v910 = vsel %vm181, %v906, %v896
    %v911 = vsel %vm181, %v907, %v898
    %v912 = vsel %vm181, %v908, %v900
    %v913 = vsel %vm186, %v909, %v165
    %v914 = vsel %vm186, %v910, %v167
    %v915 = vsel %vm186, %v911, %v169
    %v916 = vsel %vm186, %v912, %v171
    %s917 = scalar_lea.vmem %s2, 240
    %v918 = vld [vmem:[%s917] sm:$0xff]
    %v919 = vld [vmem:[%s917 + $0x8] sm:$0xff]
    %v920 = vld [vmem:[%s917 + $0x10] sm:$0xff]
    %v921 = vld [vmem:[%s917 + $0x18] sm:$0xff]
    %v922 = vld [vmem:[%s917 + $0x20] sm:$0xff]
    %v923 = vld [vmem:[%s917 + $0x28] sm:$0xff]
    %v924 = vld [vmem:[%s917 + $0x30] sm:$0xff]
    %v925 = vld [vmem:[%s917 + $0x38] sm:$0xff]
    %v926 = vld [vmem:[%s917 + $0x40] sm:$0xff]
    %v927 = vld [vmem:[%s917 + $0x48] sm:$0xff]
    %v928 = vld [vmem:[%s917 + $0x50] sm:$0xff]
    %v929 = vld [vmem:[%s917 + $0x58] sm:$0xff]
    %v930 = vld [vmem:[%s917 + $0x60] sm:$0xff]
    %v931 = vld [vmem:[%s917 + $0x68] sm:$0xff]
    %v932 = vld [vmem:[%s917 + $0x70] sm:$0x1]
    %v934 = vsel %vm206, %v913, 0
    %v937 = vsel %vm206, %v914, 0
    %v940 = vsel %vm206, %v915, 0
    %v943 = vsel %vm206, %v916, 0
    %v946 = vsel %vm94, %v932, 0
    %948 = vmatprep.subr.mxu0 0.0
    %949 = vmatpush1.msra.mxu0 0.0
    %950 = vmatprep.subr.mxu0 0.0
    %951 = vmatpush1.msra.mxu0 %v946
    %952 = vmatprep.subr.mxu0 0.0
    %953 = vmatpush1.msra.mxu0 %v931
    %954 = vmatprep.subr.mxu0 0.0
    %955 = vmatpush1.msra.mxu0 %v930
    %956 = vmatprep.subr.mxu0 0.0
    %957 = vmatpush1.msra.mxu0 %v929
    %958 = vmatprep.subr.mxu0 0.0
    %959 = vmatpush1.msra.mxu0 %v928
    %960 = vmatprep.subr.mxu0 0.0
    %961 = vmatpush1.msra.mxu0 %v927
    %962 = vmatprep.subr.mxu0 0.0
    %963 = vmatpush1.msra.mxu0 %v926
    %964 = vmatprep.subr.mxu0 0.0
    %965 = vmatpush1.msra.mxu0 %v925
    %966 = vmatprep.subr.mxu0 0.0
    %967 = vmatpush1.msra.mxu0 %v924
    %968 = vmatprep.subr.mxu0 0.0
    %969 = vmatpush1.msra.mxu0 %v923
    %970 = vmatprep.subr.mxu0 0.0
    %971 = vmatpush1.msra.mxu0 %v922
    %972 = vmatprep.subr.mxu0 0.0
    %973 = vmatpush1.msra.mxu0 %v921
    %974 = vmatprep.subr.mxu0 0.0
    %975 = vmatpush1.msra.mxu0 %v920
    %976 = vmatprep.subr.mxu0 0.0
    %977 = vmatpush1.msra.mxu0 %v919
    %978 = vmatprep.subr.mxu0 0.0
    %979 = vmatpush1.msra.mxu0 %v918
    %980 = vmatprep.subr.mxu0 0.0
    %981 = vmatpush2.msra.mxu0 0.0
    %982 = vmatprep.subr.mxu0 0.0
    %983 = vmatpush2.msra.mxu0 0.0
    %984 = vmatprep.subr.mxu0 0.0
    %985 = vmatpush2.msra.mxu0 0.0
    %986 = vmatprep.subr.mxu0 0.0
    %987 = vmatpush2.msra.mxu0 0.0
    %988 = vmatprep.subr.mxu0 0.0
    %989 = vmatpush2.msra.mxu0 0.0
    %990 = vmatprep.subr.mxu0 0.0
    %991 = vmatpush2.msra.mxu0 0.0
    %992 = vmatprep.subr.mxu0 0.0
    %993 = vmatpush2.msra.mxu0 0.0
    %994 = vmatprep.subr.mxu0 0.0
    %995 = vmatpush2.msra.mxu0 0.0
    %996 = vmatprep.subr.mxu0 0.0
    %997 = vmatpush2.msra.mxu0 0.0
    %998 = vmatprep.subr.mxu0 0.0
    %999 = vmatpush2.msra.mxu0 0.0
    %1000 = vmatprep.subr.mxu0 0.0
    %1001 = vmatpush2.msra.mxu0 0.0
    %1002 = vmatprep.subr.mxu0 0.0
    %1003 = vmatpush2.msra.mxu0 0.0
    %1004 = vmatprep.subr.mxu0 0.0
    %1005 = vmatpush2.msra.mxu0 0.0
    %1006 = vmatprep.subr.mxu0 0.0
    %1007 = vmatpush2.msra.mxu0 0.0
    %1008 = vmatprep.subr.mxu0 0.0
    %1009 = vmatpush2.msra.mxu0 0.0
    %1010 = vmatprep.subr.mxu0 0.0
    %1011 = vmatpush2.msra.mxu0 0.0
    %1012 = vmatprep.mubr.f32.mxu0 0.0
    %1013 = vmatmul.mubr.f32.gmra.mxu0 %v934
    %v1014 = vpop.f32.mrf.mxu0
    %v1015 = vadd.f32 0.0, %v1014
    %v1016 = vpop.f32.mrf.mxu0
    %1017 = vmatprep.mubr.f32.mxu0 0.0
    %1018 = vmatmul.mubr.f32.gmra.mxu0 %v937
    %v1019 = vpop.f32.mrf.mxu0
    %v1020 = vadd.f32 0.0, %v1019
    %v1021 = vpop.f32.mrf.mxu0
    %1022 = vmatprep.mubr.f32.mxu0 0.0
    %1023 = vmatmul.mubr.f32.gmra.mxu0 %v940
    %v1024 = vpop.f32.mrf.mxu0
    %v1025 = vadd.f32 0.0, %v1024
    %v1026 = vpop.f32.mrf.mxu0
    %1027 = vmatprep.mubr.f32.mxu0 0.0
    %1028 = vmatmul.mubr.f32.gmra.mxu0 %v943
    %v1029 = vpop.f32.mrf.mxu0
    %v1030 = vadd.f32 0.0, %v1029
    %v1031 = vpop.f32.mrf.mxu0
    %1032 = vdwg.mxu0
    %v1033 = vtanh.pop %v1015
    %v1034 = vtanh.pop %v1020
    %v1035 = vtanh.pop %v1025
    %v1036 = vtanh.pop %v1030
    %v1037 = vxor.u32 %v1015, 2147483648
    %v1038 = vxor.u32 %v1020, 2147483648
    %v1039 = vxor.u32 %v1025, 2147483648
    %v1040 = vxor.u32 %v1030, 2147483648
    %v1041 = vmul.f32 %v1037, 1.442695
    %v1042 = vpow.pop %v1041
    %v1043 = vmul.f32 %v1038, 1.442695
    %v1044 = vpow.pop %v1043
    %v1045 = vmul.f32 %v1039, 1.442695
    %v1046 = vpow.pop %v1045
    %v1047 = vmul.f32 %v1040, 1.442695
    %v1048 = vpow.pop %v1047
    %v1049 = vadd.f32 %v1042, 1.0
    %v1050 = vadd.f32 %v1044, 1.0
    %v1051 = vadd.f32 %v1046, 1.0
    %v1052 = vadd.f32 %v1048, 1.0
    %v1053 = vrcp.pop %v1049
    %v1054 = vmul.f32 1.0, %v1053
    %v1055 = vrcp.pop %v1050
    %v1056 = vmul.f32 1.0, %v1055
    %v1057 = vrcp.pop %v1051
    %v1058 = vmul.f32 1.0, %v1057
    %v1059 = vrcp.pop %v1052
    %v1060 = vmul.f32 1.0, %v1059
    %1065 = vrot.lane.b32.xlu0 %v1054, 96
    %v1066 = vpop.permute.xlu0 %1065
    %1067 = vrot.lane.b32.xlu0 %v1056, 96
    %v1068 = vpop.permute.xlu0 %1067
    %1069 = vrot.lane.b32.xlu0 %v1058, 96
    %v1070 = vpop.permute.xlu0 %1069
    %1071 = vrot.lane.b32.xlu0 %v1060, 96
    %v1072 = vpop.permute.xlu0 %1071
    %v1077 = vmul.f32 %v1033, %v1066
    %v1078 = vmul.f32 %v1034, %v1068
    %v1079 = vmul.f32 %v1035, %v1070
    %v1080 = vmul.f32 %v1036, %v1072
    %v1081 = vsel %vm176, %v1077, 1.0
    %v1082 = vsel %vm176, %v1078, 1.0
    %v1083 = vsel %vm176, %v1079, 1.0
    %v1084 = vsel %vm176, %v1080, 1.0
    %s1085 = scalar_lea.vmem %s3, 80
    %v1086 = vld [vmem:[%s1085] sm:$0xff]
    %v1087 = vld [vmem:[%s1085 + $0x8] sm:$0xff]
    %v1088 = vld [vmem:[%s1085 + $0x10] sm:$0xff]
    %v1089 = vld [vmem:[%s1085 + $0x18] sm:$0xff]
    %v1090 = vld [vmem:[%s1085 + $0x20] sm:$0x1]
    %v1092 = vsel %vm364, %v1081, 0
    %v1095 = vsel %vm364, %v1082, 0
    %v1098 = vsel %vm364, %v1083, 0
    %v1101 = vsel %vm364, %v1084, 0
    %v1104 = vsel %vm94, %v1090, 0
    %1106 = vmatprep.subr.mxu0 0.0
    %1107 = vmatpush1.msra.mxu0 0.0
    %1108 = vmatprep.subr.mxu0 0.0
    %1109 = vmatpush1.msra.mxu0 0.0
    %1110 = vmatprep.subr.mxu0 0.0
    %1111 = vmatpush1.msra.mxu0 0.0
    %1112 = vmatprep.subr.mxu0 0.0
    %1113 = vmatpush1.msra.mxu0 0.0
    %1114 = vmatprep.subr.mxu0 0.0
    %1115 = vmatpush1.msra.mxu0 0.0
    %1116 = vmatprep.subr.mxu0 0.0
    %1117 = vmatpush1.msra.mxu0 0.0
    %1118 = vmatprep.subr.mxu0 0.0
    %1119 = vmatpush1.msra.mxu0 0.0
    %1120 = vmatprep.subr.mxu0 0.0
    %1121 = vmatpush1.msra.mxu0 0.0
    %1122 = vmatprep.subr.mxu0 0.0
    %1123 = vmatpush1.msra.mxu0 0.0
    %1124 = vmatprep.subr.mxu0 0.0
    %1125 = vmatpush1.msra.mxu0 0.0
    %1126 = vmatprep.subr.mxu0 0.0
    %1127 = vmatpush1.msra.mxu0 0.0
    %1128 = vmatprep.subr.mxu0 0.0
    %1129 = vmatpush1.msra.mxu0 %v1104
    %1130 = vmatprep.subr.mxu0 0.0
    %1131 = vmatpush1.msra.mxu0 %v1089
    %1132 = vmatprep.subr.mxu0 0.0
    %1133 = vmatpush1.msra.mxu0 %v1088
    %1134 = vmatprep.subr.mxu0 0.0
    %1135 = vmatpush1.msra.mxu0 %v1087
    %1136 = vmatprep.subr.mxu0 0.0
    %1137 = vmatpush1.msra.mxu0 %v1086
    %1138 = vmatprep.subr.mxu0 0.0
    %1139 = vmatpush2.msra.mxu0 0.0
    %1140 = vmatprep.subr.mxu0 0.0
    %1141 = vmatpush2.msra.mxu0 0.0
    %1142 = vmatprep.subr.mxu0 0.0
    %1143 = vmatpush2.msra.mxu0 0.0
    %1144 = vmatprep.subr.mxu0 0.0
    %1145 = vmatpush2.msra.mxu0 0.0
    %1146 = vmatprep.subr.mxu0 0.0
    %1147 = vmatpush2.msra.mxu0 0.0
    %1148 = vmatprep.subr.mxu0 0.0
    %1149 = vmatpush2.msra.mxu0 0.0
    %1150 = vmatprep.subr.mxu0 0.0
    %1151 = vmatpush2.msra.mxu0 0.0
    %1152 = vmatprep.subr.mxu0 0.0
    %1153 = vmatpush2.msra.mxu0 0.0
    %1154 = vmatprep.subr.mxu0 0.0
    %1155 = vmatpush2.msra.mxu0 0.0
    %1156 = vmatprep.subr.mxu0 0.0
    %1157 = vmatpush2.msra.mxu0 0.0
    %1158 = vmatprep.subr.mxu0 0.0
    %1159 = vmatpush2.msra.mxu0 0.0
    %1160 = vmatprep.subr.mxu0 0.0
    %1161 = vmatpush2.msra.mxu0 0.0
    %1162 = vmatprep.subr.mxu0 0.0
    %1163 = vmatpush2.msra.mxu0 0.0
    %1164 = vmatprep.subr.mxu0 0.0
    %1165 = vmatpush2.msra.mxu0 0.0
    %1166 = vmatprep.subr.mxu0 0.0
    %1167 = vmatpush2.msra.mxu0 0.0
    %1168 = vmatprep.subr.mxu0 0.0
    %1169 = vmatpush2.msra.mxu0 0.0
    %1170 = vmatprep.mubr.f32.mxu0 0.0
    %1171 = vmatmul.mubr.f32.gmra.mxu0 %v1092
    %v1172 = vpop.f32.mrf.mxu0
    %v1173 = vadd.f32 0.0, %v1172
    %v1174 = vpop.f32.mrf.mxu0
    %1175 = vmatprep.mubr.f32.mxu0 0.0
    %1176 = vmatmul.mubr.f32.gmra.mxu0 %v1095
    %v1177 = vpop.f32.mrf.mxu0
    %v1178 = vadd.f32 0.0, %v1177
    %v1179 = vpop.f32.mrf.mxu0
    %1180 = vmatprep.mubr.f32.mxu0 0.0
    %1181 = vmatmul.mubr.f32.gmra.mxu0 %v1098
    %v1182 = vpop.f32.mrf.mxu0
    %v1183 = vadd.f32 0.0, %v1182
    %v1184 = vpop.f32.mrf.mxu0
    %1185 = vmatprep.mubr.f32.mxu0 0.0
    %1186 = vmatmul.mubr.f32.gmra.mxu0 %v1101
    %v1187 = vpop.f32.mrf.mxu0
    %v1188 = vadd.f32 0.0, %v1187
    %v1189 = vpop.f32.mrf.mxu0
    %1190 = vdwg.mxu0
    %v1191 = vadd.f32 %v835, %v1173
    %v1192 = vadd.f32 %v836, %v1178
    %v1193 = vadd.f32 %v837, %v1183
    %v1194 = vadd.f32 %v838, %v1188
    %1199 = vrot.lane.b32.xlu0 %v1191, 96
    %v1200 = vpop.permute.xlu0 %1199
    %1201 = vrot.lane.b32.xlu0 %v1192, 96
    %v1202 = vpop.permute.xlu0 %1201
    %1203 = vrot.lane.b32.xlu0 %v1193, 96
    %v1204 = vpop.permute.xlu0 %1203
    %1205 = vrot.lane.b32.xlu0 %v1194, 96
    %v1206 = vpop.permute.xlu0 %1205
    %1211 = vst.msk [vmem:[#allocation2] sm:$0xff] %vm176, %v1200
    %1212 = vst.msk [vmem:[#allocation2 + $0x8] sm:$0xff] %vm176, %v1202
    %1213 = vst.msk [vmem:[#allocation2 + $0x10] sm:$0xff] %vm176, %v1204
    %1214 = vst.msk [vmem:[#allocation2 + $0x18] sm:$0xff] %vm176, %v1206
    // Predicated region
    $region18: #{wn_forward.1} parent=1 // pred_check
      _
    $region19: #{wn_forward.1} parent=1 // pred_check_branch
      %1216 = sbr.rel (0) target = $region21
    $region20: #{wn_forward.1} parent=1 // pred_region
      %s1218 = ssub.s32 512, 512
      %1219 = vsyncadd [#allocation3], %s1218
      %s1220 = sshll.u32 [#allocation2], 4
      %s1221 = int_to_ptr.vmem [resolvable:$true] %s1220
      %1226 = dma.vmem_to_hbm [thread:$0]  %s1221, 512, %s4, [#allocation3], 128, 128, 8
    $region21: #{wn_forward.1} parent=1 // pred_fallthru
      _
    // Predicated region
    $region22: #{wn_forward.1} parent=1 // pred_check
      _
    $region23: #{wn_forward.1} parent=1 // pred_check_branch
      %1228 = sbr.rel (0) target = $region25
    $region24: #{wn_forward.1} parent=1 // pred_region
      %1229 = dma.done [#allocation3], 512
    $region25: #{wn_forward.1} parent=1 // pred_fallthru
      _
    %1230 = vsyncpa [#allocation3], 1

</llo_original>
